<compile_context>
chip_gen: v7x
topology: tpu7x:2x2x1
jax: 0.10.0
libtpu: 0.0.40
codegen_flags: <defaults>
</compile_context>

<pallas_src>
import numpy as np
import jax
import jax.numpy as jnp
from jax.experimental import pallas as pl
from jax.experimental.pallas import tpu as pltpu


def _gemm_bias_kernel(w_ref, a_ref, b_ref, o_ref):
    # W: (C_out, K_pad)  A: (K_pad, P)  b: (C_out, 1)  ->  O: (C_out, P)
    # f32 in / f32 MXU accumulate / f32 out: no casts needed.
    o_ref[...] = (
        jnp.dot(w_ref[...], a_ref[...], preferred_element_type=jnp.float32)
        + b_ref[...]
    )


def _pallas_gemm_bias(w_mat, a, b_col):
    C_out, _ = w_mat.shape
    _, P = a.shape
    return pl.pallas_call(
        _gemm_bias_kernel,
        out_shape=jax.ShapeDtypeStruct((C_out, P), jnp.float32),
        in_specs=[
            pl.BlockSpec(memory_space=pltpu.MemorySpace.VMEM),
            pl.BlockSpec(memory_space=pltpu.MemorySpace.VMEM),
            pl.BlockSpec(memory_space=pltpu.MemorySpace.VMEM),
        ],
        out_specs=pl.BlockSpec(memory_space=pltpu.MemorySpace.VMEM),
    )(w_mat, a, b_col)


def conv_transpose2d(x, weight, bias, stride=(1, 1), padding=(0, 1)):
    """ConvTranspose2d with stride=1.

    x:      (N, C_in, H, W)        NCHW
    weight: (C_in, C_out, kH, kW)  (PyTorch ConvTranspose2d layout)
    bias:   (C_out,)
    """
    assert stride == (1, 1), "only stride 1 implemented"
    N, C_in, H, W = x.shape
    _, C_out, kH, kW = weight.shape
    pH, pW = padding

    H_out = (H - 1) * stride[0] - 2 * pH + kH
    W_out = (W - 1) * stride[1] - 2 * pW + kW
    P = N * H_out * W_out

    # Transposed conv == ordinary conv over input padded by (k-1-p) with the
    # kernel spatially flipped and in/out channels swapped.
    eH, eW = kH - 1 - pH, kW - 1 - pW
    x_pad = jnp.pad(x, ((0, 0), (0, 0), (eH, eH), (eW, eW)))      # (N,Cin,Hp,Wp)

    # Tap-wise window extraction: loop count is kH*kW (fixed, tiny), not
    # H_out*W_out.  Result A has P on the last (lane) dim.
    taps = [x_pad[:, :, kh:kh + H_out, kw:kw + W_out]
            for kh in range(kH) for kw in range(kW)]              # (N,Cin,Hout,Wout)
    a = jnp.stack(taps, axis=2)                                   # (N,Cin,T,Hout,Wout)
    a = a.transpose(1, 2, 0, 3, 4).reshape(C_in * kH * kW, P)     # (K, P)

    # Pad contraction dim K to a sublane multiple (f32 sublane = 8): 12 -> 16.
    K = C_in * kH * kW
    K_pad = ((K + 7) // 8) * 8
    a = jnp.pad(a, ((0, K_pad - K), (0, 0)))

    # Equivalent forward-conv weight, flattened and zero-padded to K_pad.
    w_conv = jnp.flip(weight, axis=(2, 3)).transpose(1, 0, 2, 3)  # (Cout,Cin,kH,kW)
    w_mat = jnp.pad(w_conv.reshape(C_out, K), ((0, 0), (0, K_pad - K)))

    o = _pallas_gemm_bias(w_mat, a, bias.reshape(C_out, 1))       # (Cout, P)
    # (Cout, N*Hout*Wout) -> (N, Cout, Hout, Wout)
    return o.reshape(C_out, N, H_out, W_out).transpose(1, 0, 2, 3)


if __name__ == "__main__":
    key = jax.random.PRNGKey(0)
    kx, kw, kb = jax.random.split(key, 3)

    C_in, C_out, kH, kW = 3, 6, 2, 2
    x1 = jax.random.normal(kx, (1, C_in, 2, 2), dtype=jnp.float32)

    # Deterministic parameter init (PyTorch-style uniform bound 1/sqrt(fan_in)).
    fan_in = C_in * kH * kW
    bound = 1.0 / np.sqrt(fan_in)
    weight = jax.random.uniform(kw, (C_in, C_out, kH, kW),
                                minval=-bound, maxval=bound, dtype=jnp.float32)
    bias = jax.random.uniform(kb, (C_out,),
                              minval=-bound, maxval=bound, dtype=jnp.float32)

    out = conv_transpose2d(x1, weight, bias, stride=(1, 1), padding=(0, 1))
    out = jax.block_until_ready(out)
    assert out.shape == (1, C_out, 3, 1), out.shape

    # Independent pure-JAX reference: direct transposed-conv scatter formula.
    N, _, H, W = x1.shape
    pH, pW = 0, 1
    H_out, W_out = 3, 1
    full = jnp.zeros((N, C_out, H + kH - 1, W + kW - 1), jnp.float32)
    for ih in range(H):
        for iw in range(W):
            contrib = jnp.einsum("nc,cokl->nokl", x1[:, :, ih, iw], weight)
            full = full.at[:, :, ih:ih + kH, iw:iw + kW].add(contrib)
    ref = full[:, :, pH:pH + H_out, pW:pW + W_out] + bias.reshape(1, C_out, 1, 1)

    np.testing.assert_allclose(np.asarray(out), np.asarray(ref),
                               rtol=1e-5, atol=1e-5)
    print("KERNEL_OK")
</pallas_src>

<mosaic_0001>
module attributes {stable_mosaic.version = 11 : i64} {
  func.func @_gemm_bias_kernel(%arg0: memref<6x16xf32, #tpu.memory_space<vmem>>, %arg1: memref<16x3xf32, #tpu.memory_space<vmem>>, %arg2: memref<6x1xf32, #tpu.memory_space<vmem>>, %arg3: memref<6x3xf32, #tpu.memory_space<vmem>>) attributes {dimension_semantics = [], scalar_prefetch = 0 : i64, scratch_operands = 0 : i64, tpu.core_type = #tpu.core_type<tc>} {
    %c0 = arith.constant 0 : index
    %c0_0 = arith.constant 0 : index
    %0 = vector.load %arg0[%c0, %c0_0] : memref<6x16xf32, #tpu.memory_space<vmem>>, vector<6x16xf32>
    %c0_1 = arith.constant 0 : index
    %c0_2 = arith.constant 0 : index
    %1 = vector.load %arg1[%c0_1, %c0_2] : memref<16x3xf32, #tpu.memory_space<vmem>>, vector<16x3xf32>
    %cst = arith.constant dense<0.000000e+00> : vector<6x3xf32>
    %2 = tpu.matmul %0, %1, %cst {dimension_numbers = #tpu.dot_dimension_numbers<[1], [0], [0], [1], [0, 0, 1, 1], [], []>} : vector<6x16xf32>, vector<16x3xf32>, vector<6x3xf32> -> vector<6x3xf32>
    %c0_3 = arith.constant 0 : index
    %c0_4 = arith.constant 0 : index
    %3 = vector.load %arg2[%c0_3, %c0_4] : memref<6x1xf32, #tpu.memory_space<vmem>>, vector<6x1xf32>
    %4 = vector.broadcast %3 : vector<6x1xf32> to vector<6x3xf32>
    %5 = arith.addf %2, %4 : vector<6x3xf32>
    %c0_5 = arith.constant 0 : index
    %c0_6 = arith.constant 0 : index
    %6 = vector.load %arg3[%c0_5, %c0_6] : memref<6x3xf32, #tpu.memory_space<vmem>>, vector<6x3xf32>
    tpu.vector_store %arg3[%c0_5, %c0_6], %5 {strides = array<i32>} : memref<6x3xf32, #tpu.memory_space<vmem>>, vector<6x3xf32>,
    return
  }
}

</mosaic_0001>

<llo_original>
// kernel: tpu_custom_call.1
$region0: #{tpu_custom_call.1}
  #allocation0 [shape = 'u32[]', space=smem, size = 0x4, offset = 0x4, fixed_abs, tag = 'smem constant byte address 0x4 - core index']
  #allocation1 [shape = 'u32[144,128]{1,0:T(1,128)}', space=vmem, size = 0x12000, scoped, tag = 'internal scratch']
  %s0 = inlined_call_operand.vmem [shape: f32[6,16], index: 0, kind: input, shape index: {}]
  %s1 = inlined_call_operand.vmem [shape: f32[16,3], index: 1, kind: input, shape index: {}]
  %s2 = inlined_call_operand.vmem [shape: f32[6,1], index: 2, kind: input, shape index: {}]
  %s3 = inlined_call_operand.vmem [shape: f32[6,3], index: 3, kind: output, shape index: {}]
  %s4 = sld [smem:[#allocation0]]
  $region22: #{tpu_custom_call.1} parent=0
    _
  %s6 = ssub.s32 1, %s4
  %s7 = scalar_select 0, %s6, %s4
  // Predicated region
  $region2: #{tpu_custom_call.1} parent=0 // pred_check
    _
  $region3: #{tpu_custom_call.1} parent=0 // pred_check_branch
    %9 = sbr.rel (0) target = $region5
  $region4: #{tpu_custom_call.1} parent=0 // pred_region
    _
  $region5: #{tpu_custom_call.1} parent=0 // pred_fallthru
    _
  // Predicated region
  $region6: #{tpu_custom_call.1} parent=0 // pred_check
    _
  $region7: #{tpu_custom_call.1} parent=0 // pred_check_branch
    %11 = sbr.rel (0) target = $region9
  $region8: #{tpu_custom_call.1} parent=0 // pred_region
    _
  $region9: #{tpu_custom_call.1} parent=0 // pred_fallthru
    _
  // Predicated region
  $region10: #{tpu_custom_call.1} parent=0 // pred_check
    _
  $region11: #{tpu_custom_call.1} parent=0 // pred_check_branch
    %13 = sbr.rel (0) target = $region13
  $region12: #{tpu_custom_call.1} parent=0 // pred_region
    _
  $region13: #{tpu_custom_call.1} parent=0 // pred_fallthru
    _
  %v14 = vld [vmem:[%s0] sm:$0x3f]
  %v15 = vld [vmem:[%s1] sm:$0xff]
  %v16 = vld [vmem:[%s1 + $0x8] sm:$0xff]
  %v17 = vld [vmem:[%s2] sm:$0x3f]
  %19 = vset.pattern.permute.xlu0 0
  %20 = vperm.xlu0 %19, %v17
  %v21 = vpop.permute.xlu0 %20
  %vm23 = vcmask 130048
  %v25 = vsel %vm23, %v14, 0
  %27 = vmatprep.subr.mxu0 0.0
  %28 = vmatpush1.msra.mxu0 %v15
  %29 = vmatprep.subr.mxu0 0.0
  %30 = vmatpush1.msra.mxu0 %v16
  %31 = vmatprep.subr.mxu0 0.0
  %32 = vmatpush1.msra.mxu0 0.0
  %33 = vmatprep.subr.mxu0 0.0
  %34 = vmatpush1.msra.mxu0 0.0
  %35 = vmatprep.subr.mxu0 0.0
  %36 = vmatpush1.msra.mxu0 0.0
  %37 = vmatprep.subr.mxu0 0.0
  %38 = vmatpush1.msra.mxu0 0.0
  %39 = vmatprep.subr.mxu0 0.0
  %40 = vmatpush1.msra.mxu0 0.0
  %41 = vmatprep.subr.mxu0 0.0
  %42 = vmatpush1.msra.mxu0 0.0
  %43 = vmatprep.subr.mxu0 0.0
  %44 = vmatpush1.msra.mxu0 0.0
  %45 = vmatprep.subr.mxu0 0.0
  %46 = vmatpush1.msra.mxu0 0.0
  %47 = vmatprep.subr.mxu0 0.0
  %48 = vmatpush1.msra.mxu0 0.0
  %49 = vmatprep.subr.mxu0 0.0
  %50 = vmatpush1.msra.mxu0 0.0
  %51 = vmatprep.subr.mxu0 0.0
  %52 = vmatpush1.msra.mxu0 0.0
  %53 = vmatprep.subr.mxu0 0.0
  %54 = vmatpush1.msra.mxu0 0.0
  %55 = vmatprep.subr.mxu0 0.0
  %56 = vmatpush1.msra.mxu0 0.0
  %57 = vmatprep.subr.mxu0 0.0
  %58 = vmatpush1.msra.mxu0 0.0
  %59 = vmatprep.subr.mxu0 0.0
  %60 = vmatpush1.msra.mxu0 0.0
  %61 = vmatprep.subr.mxu0 0.0
  %62 = vmatpush1.msra.mxu0 0.0
  %63 = vmatprep.subr.mxu0 0.0
  %64 = vmatpush1.msra.mxu0 0.0
  %65 = vmatprep.subr.mxu0 0.0
  %66 = vmatpush1.msra.mxu0 0.0
  %67 = vmatprep.subr.mxu0 0.0
  %68 = vmatpush1.msra.mxu0 0.0
  %69 = vmatprep.subr.mxu0 0.0
  %70 = vmatpush1.msra.mxu0 0.0
  %71 = vmatprep.subr.mxu0 0.0
  %72 = vmatpush1.msra.mxu0 0.0
  %73 = vmatprep.subr.mxu0 0.0
  %74 = vmatpush1.msra.mxu0 0.0
  %75 = vmatprep.subr.mxu0 0.0
  %76 = vmatpush1.msra.mxu0 0.0
  %77 = vmatprep.subr.mxu0 0.0
  %78 = vmatpush1.msra.mxu0 0.0
  %79 = vmatprep.subr.mxu0 0.0
  %80 = vmatpush1.msra.mxu0 0.0
  %81 = vmatprep.subr.mxu0 0.0
  %82 = vmatpush1.msra.mxu0 0.0
  %83 = vmatprep.subr.mxu0 0.0
  %84 = vmatpush1.msra.mxu0 0.0
  %85 = vmatprep.subr.mxu0 0.0
  %86 = vmatpush1.msra.mxu0 0.0
  %87 = vmatprep.subr.mxu0 0.0
  %88 = vmatpush1.msra.mxu0 0.0
  %89 = vmatprep.subr.mxu0 0.0
  %90 = vmatpush1.msra.mxu0 0.0
  %91 = vmatprep.mubr.f32.mxu0 0.0
  %92 = vmatmul.mubr.f32.gmra.mrb[0].mxu0 %v25
  %v93 = vpop.f32.mrb[0].mxu0
  %v94 = vadd.f32 %v21, %v93
  %v95 = vpop.f32.mrb[0].mxu0
  %96 = vdwg.mxu0
  %vm97 = vcmask 21504
  %98 = vst.msk [vmem:[%s3] sm:$0x3f] %vm97, %v94
  // Predicated region
  $region14: #{tpu_custom_call.1} parent=0 // pred_check
    _
  $region15: #{tpu_custom_call.1} parent=0 // pred_check_branch
    %100 = sbr.rel (0) target = $region17
  $region16: #{tpu_custom_call.1} parent=0 // pred_region
    _
  $region17: #{tpu_custom_call.1} parent=0 // pred_fallthru
    _
  // Predicated region
  $region18: #{tpu_custom_call.1} parent=0 // pred_check
    _
  $region19: #{tpu_custom_call.1} parent=0 // pred_check_branch
    %102 = sbr.rel (0) target = $region21
  $region20: #{tpu_custom_call.1} parent=0 // pred_region
    _
  $region21: #{tpu_custom_call.1} parent=0 // pred_fallthru
    _

</llo_original>
